<compile_context>
chip_gen: v5e
topology: v5e:2x2
jax: 0.10.0
libtpu: 0.0.40
codegen_flags: <defaults>
</compile_context>

<pallas_src>
import functools
import math

import jax
import jax.numpy as jnp
from jax.experimental import pallas as pl
from jax.experimental.pallas import tpu as pltpu


def _gate_kernel(x_ref, w_ref, b_ref, *out_refs, top_k, num_expert, emit_gate):
    # x_ref : (T, D) f32   w_ref : (D, Ep) bf16   b_ref : (1, Ep) f32
    if emit_gate:
        gate_ref, val_ref, idx_ref = out_refs
    else:
        val_ref, idx_ref = out_refs

    x = x_ref[...].astype(jnp.bfloat16)            # in-kernel cast (x stays f32 in HBM)
    logits = jnp.dot(x, w_ref[...],
                     preferred_element_type=jnp.float32) + b_ref[...]
    T, Ep = logits.shape

    # numerically stable softmax; exact divide (free under the memory bound)
    m = jnp.max(logits, axis=-1, keepdims=True)    # (T, 1)
    e = jnp.exp(logits - m)                        # (T, Ep)
    s = jnp.sum(e, axis=-1, keepdims=True)         # (T, 1)
    inv = 1.0 / s                                  # exact reciprocal

    if emit_gate:
        gate_ref[...] = (e * inv).astype(gate_ref.dtype)

    lane = jax.lax.broadcasted_iota(jnp.int32, (T, Ep), 1)
    real = lane < num_expert                       # mask out padded lanes

    # top-k by iterative argmax in exp-space (padded lanes set to -1 so they
    # never win; real e > 0).  First iteration fused with the softmax:
    # argmax(probs) == argmax(logits) (reuse m); top-1 exp-space value is 1.
    work = jnp.where(real, e, -1.0)
    idx0 = jnp.min(jnp.where(real & (logits == m), lane, Ep),
                   axis=-1, keepdims=True)         # lowest index on ties
    vals = [jnp.ones((T, 1), jnp.float32)]
    idxs = [idx0]
    prev = idx0
    for _ in range(1, top_k):
        work = jnp.where(lane == prev, -1.0, work)
        mx = jnp.max(work, axis=-1, keepdims=True)
        prev = jnp.min(jnp.where(work == mx, lane, Ep), axis=-1, keepdims=True)
        vals.append(mx)
        idxs.append(prev)

    # Narrow (T, top_k) outputs: column k holds the k-th top value / index.
    lane_k = jax.lax.broadcasted_iota(jnp.int32, (T, top_k), 1)
    val_nar = jnp.zeros((T, top_k), jnp.float32)
    idx_nar = jnp.zeros((T, top_k), jnp.int32)
    for k in range(top_k):
        val_nar = jnp.where(lane_k == k, vals[k], val_nar)
        idx_nar = jnp.where(lane_k == k, idxs[k], idx_nar)
    val_ref[...] = (val_nar * inv).astype(val_ref.dtype)   # back to prob-space
    idx_ref[...] = idx_nar


def gate_forward(inp, weight, bias=None, *, top_k=2, tile_tokens=1024,
                 return_all_scores=False,
                 vmem_budget_bytes=40 * 1024 * 1024):
    """Pallas equivalent of Gate.forward (inference path).

    inp    : (N, d_model) float32
    weight : (num_expert, d_model) float32   (nn.Linear layout)
    bias   : (num_expert,) float32 or None
    Returns (gate_top_k_idx, gate_score[, gate]) like the PyTorch module.
    """
    n, d_model = inp.shape
    num_expert = weight.shape[0]
    top_k = min(top_k, num_expert)

    LANES = 128
    e_pad = ((num_expert + LANES - 1) // LANES) * LANES

    # Pad the gate weight / bias along the expert axis; padded logits get a
    # large negative bias so they softmax to 0 and never win top-k.
    w_t = jnp.zeros((d_model, e_pad), jnp.bfloat16).at[:, :num_expert].set(
        weight.T.astype(jnp.bfloat16))
    if bias is None:
        bias = jnp.zeros((num_expert,), jnp.float32)
    b_pad = jnp.full((1, e_pad), -1e30, jnp.float32).at[0, :num_expert].set(
        bias.astype(jnp.float32))

    x = inp  # stays f32 in HBM; cast to bf16 in-kernel (no wrapper copy pass)

    def vmem_estimate(t):
        xb = 2 * t * d_model * x.dtype.itemsize          # x tile, double buffered
        wb = 2 * d_model * e_pad * 2                     # bf16 W (grid-invariant)
        bb = 2 * 8 * e_pad * 4                           # bias block (sublane padded)
        gb = (2 * t * e_pad * 4) if return_all_scores else 0
        tb = 2 * 2 * t * LANES * 4                       # narrow val/idx (lane padded)
        tmp = 8 * t * e_pad * 4                          # logits/e/work/iota/select temps
        return xb + wb + bb + gb + tb + tmp

    cdiv = lambda a, b: -(-a // b)

    tile = max(8, min(((tile_tokens + 7) // 8) * 8, ((n + 7) // 8) * 8))
    while tile > 8 and vmem_estimate(tile) > vmem_budget_bytes:
        tile = max(8, (tile // 2 // 8) * 8)

    grid = cdiv(n, tile)
    # Even number of grid steps so v7x's two TensorCores split the parallel
    # axis evenly (no idle step on one core).
    if grid > 1 and grid % 2 == 1:
        tile = max(8, ((cdiv(n, grid + 1) + 7) // 8) * 8)
        grid = cdiv(n, tile)

    # Cap at 48 MiB (v7x has only 64 MiB VMEM per TensorCore); never below
    # the 32 MiB default scoped limit.
    vmem_limit = int(min(48 << 20, max(vmem_estimate(tile) + (8 << 20), 32 << 20)))

    kernel = functools.partial(_gate_kernel, top_k=top_k, num_expert=num_expert,
                               emit_gate=return_all_scores)

    out_shape = []
    out_specs = []
    if return_all_scores:
        out_shape.append(jax.ShapeDtypeStruct((n, e_pad), jnp.float32))
        out_specs.append(pl.BlockSpec((tile, e_pad), lambda i: (i, 0)))
    out_shape += [jax.ShapeDtypeStruct((n, top_k), jnp.float32),
                  jax.ShapeDtypeStruct((n, top_k), jnp.int32)]
    out_specs += [pl.BlockSpec((tile, top_k), lambda i: (i, 0)),
                  pl.BlockSpec((tile, top_k), lambda i: (i, 0))]

    outs = pl.pallas_call(
        kernel,
        out_shape=tuple(out_shape),
        grid_spec=pltpu.PrefetchScalarGridSpec(
            num_scalar_prefetch=0,
            grid=(grid,),
            in_specs=[
                pl.BlockSpec((tile, d_model), lambda i: (i, 0)),
                # TODO(synk): pipeline_mode=pl.Buffered(1) on W / bias (their
                # index_map is grid-invariant) would save one unused VMEM
                # buffer each; left at the default for lowering compatibility.
                pl.BlockSpec((d_model, e_pad), lambda i: (0, 0)),
                pl.BlockSpec((1, e_pad), lambda i: (0, 0)),
            ],
            out_specs=out_specs,
        ),
        compiler_params=pltpu.CompilerParams(
            dimension_semantics=("parallel",),
            vmem_limit_bytes=vmem_limit),
    )(x, w_t, b_pad)

    if return_all_scores:
        gate_p, val_p, idx_p = outs
        return idx_p, val_p, gate_p[:, :num_expert]
    val_p, idx_p = outs
    return idx_p, val_p


if __name__ == "__main__":
    d_model = 32
    num_expert = 8
    top_k = 2
    batch, seq = 2, 8
    n_tokens = batch * seq  # 16

    key = jax.random.PRNGKey(0)
    k_w, k_b, k_x = jax.random.split(key, 3)

    # nn.Linear(d_model, num_expert): weight (num_expert, d_model), bias (num_expert,)
    bound = 1.0 / math.sqrt(d_model)
    weight = jax.random.uniform(k_w, (num_expert, d_model), jnp.float32,
                                minval=-bound, maxval=bound)
    bias = jax.random.uniform(k_b, (num_expert,), jnp.float32,
                              minval=-bound, maxval=bound)
    x = jax.random.normal(k_x, (n_tokens, d_model), jnp.float32)

    top_idx, top_val, gate = gate_forward(x, weight, bias, top_k=top_k,
                                          return_all_scores=True)
    top_idx2, top_val2 = gate_forward(x, weight, bias, top_k=top_k,
                                      return_all_scores=False)
    jax.block_until_ready((top_idx, top_val, gate, top_idx2, top_val2))

    # reference at matching precision (bf16 matmul inputs, f32 accumulate/softmax)
    x_r = x.astype(jnp.bfloat16).astype(jnp.float32)
    w_r = weight.astype(jnp.bfloat16).astype(jnp.float32)
    logits_ref = x_r @ w_r.T + bias
    gate_ref = jax.nn.softmax(logits_ref, axis=-1)
    val_ref, idx_ref = jax.lax.top_k(gate_ref, top_k)

    assert gate.shape == (n_tokens, num_expert)
    assert top_val.shape == (n_tokens, top_k)
    assert top_idx.shape == (n_tokens, top_k)
    assert jnp.allclose(gate, gate_ref, atol=1e-4), float(jnp.abs(gate - gate_ref).max())
    assert jnp.allclose(top_val, val_ref, atol=1e-4), float(jnp.abs(top_val - val_ref).max())
    assert jnp.array_equal(top_idx, idx_ref.astype(jnp.int32))
    assert jnp.array_equal(top_idx2, top_idx)
    assert jnp.allclose(top_val2, top_val)

    print("KERNEL_OK")
</pallas_src>

<mosaic_0001>
module attributes {stable_mosaic.version = 11 : i64} {
  func.func @_gate_kernel(%arg0: i32, %arg1: memref<16x32xf32, #tpu.memory_space<vmem>>, %arg2: memref<32x128xbf16, #tpu.memory_space<vmem>>, %arg3: memref<1x128xf32, #tpu.memory_space<vmem>>, %arg4: memref<16x128xf32, #tpu.memory_space<vmem>>, %arg5: memref<16x2xf32, #tpu.memory_space<vmem>>, %arg6: memref<16x2xi32, #tpu.memory_space<vmem>>) attributes {dimension_semantics = [#tpu.dimension_semantics<parallel>], iteration_bounds = array<i64: 1>, scalar_prefetch = 0 : i64, scratch_operands = 0 : i64, tpu.core_type = #tpu.core_type<tc>, window_params = [{transform_indices = @transform_0, window_bounds = array<i64: 16, 32>}, {pipeline_mode = #tpu.pipeline_mode<synchronous>, transform_indices = @transform_1, window_bounds = array<i64: 32, 128>}, {pipeline_mode = #tpu.pipeline_mode<synchronous>, transform_indices = @transform_2, window_bounds = array<i64: 1, 128>}, {transform_indices = @transform_3, window_bounds = array<i64: 16, 128>}, {transform_indices = @transform_4, window_bounds = array<i64: 16, 2>}, {transform_indices = @transform_5, window_bounds = array<i64: 16, 2>}]} {
    %c0 = arith.constant 0 : index
    %c0_0 = arith.constant 0 : index
    %0 = vector.load %arg1[%c0, %c0_0] : memref<16x32xf32, #tpu.memory_space<vmem>>, vector<16x32xf32>
    %1 = arith.truncf %0 : vector<16x32xf32> to vector<16x32xbf16>
    %c0_1 = arith.constant 0 : index
    %c0_2 = arith.constant 0 : index
    %2 = vector.load %arg2[%c0_1, %c0_2] : memref<32x128xbf16, #tpu.memory_space<vmem>>, vector<32x128xbf16>
    %cst = arith.constant dense<0.000000e+00> : vector<16x128xf32>
    %3 = tpu.matmul %1, %2, %cst {dimension_numbers = #tpu.dot_dimension_numbers<[1], [0], [0], [1], [0, 0, 1, 1], [], []>} : vector<16x32xbf16>, vector<32x128xbf16>, vector<16x128xf32> -> vector<16x128xf32>
    %c0_3 = arith.constant 0 : index
    %c0_4 = arith.constant 0 : index
    %4 = vector.load %arg3[%c0_3, %c0_4] : memref<1x128xf32, #tpu.memory_space<vmem>>, vector<1x128xf32>
    %5 = vector.broadcast %4 : vector<1x128xf32> to vector<16x128xf32>
    %6 = arith.addf %3, %5 : vector<16x128xf32>
    %cst_5 = arith.constant dense<0xFF800000> : vector<16xf32>
    %7 = vector.multi_reduction <maximumf>, %6, %cst_5 [1] : vector<16x128xf32> to vector<16xf32>
    %8 = vector.shape_cast %7 : vector<16xf32> to vector<16x1xf32>
    %9 = vector.broadcast %8 : vector<16x1xf32> to vector<16x128xf32>
    %10 = arith.subf %6, %9 : vector<16x128xf32>
    %11 = math.exp %10 : vector<16x128xf32>
    %cst_6 = arith.constant dense<0.000000e+00> : vector<16xf32>
    %12 = vector.multi_reduction <add>, %11, %cst_6 [1] : vector<16x128xf32> to vector<16xf32>
    %13 = vector.shape_cast %12 : vector<16xf32> to vector<16x1xf32>
    %cst_7 = arith.constant 1.000000e+00 : f32
    %14 = vector.broadcast %cst_7 : f32 to vector<16x1xf32>
    %15 = arith.divf %14, %13 : vector<16x1xf32>
    %16 = vector.broadcast %15 : vector<16x1xf32> to vector<16x128xf32>
    %17 = arith.mulf %11, %16 : vector<16x128xf32>
    %c0_8 = arith.constant 0 : index
    %c0_9 = arith.constant 0 : index
    %18 = vector.load %arg4[%c0_8, %c0_9] : memref<16x128xf32, #tpu.memory_space<vmem>>, vector<16x128xf32>
    tpu.vector_store %arg4[%c0_8, %c0_9], %17 {strides = array<i32>} : memref<16x128xf32, #tpu.memory_space<vmem>>, vector<16x128xf32>,
    %19 = tpu.iota {dimensions = array<i32: 1>} : vector<16x128xi32>
    %c8_i32 = arith.constant 8 : i32
    %20 = vector.broadcast %c8_i32 : i32 to vector<16x128xi32>
    %21 = arith.cmpi slt, %19, %20 : vector<16x128xi32>
    %cst_10 = arith.constant -1.000000e+00 : f32
    %22 = vector.broadcast %cst_10 : f32 to vector<16x128xf32>
    %23 = arith.select %21, %11, %22 : vector<16x128xi1>, vector<16x128xf32>
    %24 = vector.broadcast %8 : vector<16x1xf32> to vector<16x128xf32>
    %25 = arith.cmpf oeq, %6, %24 : vector<16x128xf32>
    %26 = arith.andi %21, %25 : vector<16x128xi1>
    %c128_i32 = arith.constant 128 : i32
    %27 = vector.broadcast %c128_i32 : i32 to vector<16x128xi32>
    %28 = arith.select %26, %19, %27 : vector<16x128xi1>, vector<16x128xi32>
    %cst_11 = arith.constant dense<2147483647> : vector<16xi32>
    %29 = vector.multi_reduction <minsi>, %28, %cst_11 [1] : vector<16x128xi32> to vector<16xi32>
    %30 = vector.shape_cast %29 : vector<16xi32> to vector<16x1xi32>
    %cst_12 = arith.constant 1.000000e+00 : f32
    %31 = vector.broadcast %cst_12 : f32 to vector<16x1xf32>
    %32 = vector.broadcast %30 : vector<16x1xi32> to vector<16x128xi32>
    %33 = arith.cmpi eq, %19, %32 : vector<16x128xi32>
    %cst_13 = arith.constant -1.000000e+00 : f32
    %34 = vector.broadcast %cst_13 : f32 to vector<16x128xf32>
    %35 = arith.select %33, %34, %23 : vector<16x128xi1>, vector<16x128xf32>
    %cst_14 = arith.constant dense<0xFF800000> : vector<16xf32>
    %36 = vector.multi_reduction <maximumf>, %35, %cst_14 [1] : vector<16x128xf32> to vector<16xf32>
    %37 = vector.shape_cast %36 : vector<16xf32> to vector<16x1xf32>
    %38 = vector.broadcast %37 : vector<16x1xf32> to vector<16x128xf32>
    %39 = arith.cmpf oeq, %35, %38 : vector<16x128xf32>
    %c128_i32_15 = arith.constant 128 : i32
    %40 = vector.broadcast %c128_i32_15 : i32 to vector<16x128xi32>
    %41 = arith.select %39, %19, %40 : vector<16x128xi1>, vector<16x128xi32>
    %cst_16 = arith.constant dense<2147483647> : vector<16xi32>
    %42 = vector.multi_reduction <minsi>, %41, %cst_16 [1] : vector<16x128xi32> to vector<16xi32>
    %43 = vector.shape_cast %42 : vector<16xi32> to vector<16x1xi32>
    %44 = tpu.iota {dimensions = array<i32: 1>} : vector<16x2xi32>
    %cst_17 = arith.constant 0.000000e+00 : f32
    %45 = vector.broadcast %cst_17 : f32 to vector<16x2xf32>
    %c0_i32 = arith.constant 0 : i32
    %46 = vector.broadcast %c0_i32 : i32 to vector<16x2xi32>
    %c0_i32_18 = arith.constant 0 : i32
    %47 = vector.broadcast %c0_i32_18 : i32 to vector<16x2xi32>
    %48 = arith.cmpi eq, %44, %47 : vector<16x2xi32>
    %49 = vector.shape_cast %31 : vector<16x1xf32> to vector<16x1xf32>
    %50 = vector.broadcast %49 : vector<16x1xf32> to vector<16x2xf32>
    %51 = arith.select %48, %50, %45 : vector<16x2xi1>, vector<16x2xf32>
    %c0_i32_19 = arith.constant 0 : i32
    %52 = vector.broadcast %c0_i32_19 : i32 to vector<16x2xi32>
    %53 = arith.cmpi eq, %44, %52 : vector<16x2xi32>
    %54 = vector.shape_cast %30 : vector<16x1xi32> to vector<16x1xi32>
    %55 = vector.broadcast %54 : vector<16x1xi32> to vector<16x2xi32>
    %56 = arith.select %53, %55, %46 : vector<16x2xi1>, vector<16x2xi32>
    %c1_i32 = arith.constant 1 : i32
    %57 = vector.broadcast %c1_i32 : i32 to vector<16x2xi32>
    %58 = arith.cmpi eq, %44, %57 : vector<16x2xi32>
    %59 = vector.shape_cast %37 : vector<16x1xf32> to vector<16x1xf32>
    %60 = vector.broadcast %59 : vector<16x1xf32> to vector<16x2xf32>
    %61 = arith.select %58, %60, %51 : vector<16x2xi1>, vector<16x2xf32>
    %c1_i32_20 = arith.constant 1 : i32
    %62 = vector.broadcast %c1_i32_20 : i32 to vector<16x2xi32>
    %63 = arith.cmpi eq, %44, %62 : vector<16x2xi32>
    %64 = vector.shape_cast %43 : vector<16x1xi32> to vector<16x1xi32>
    %65 = vector.broadcast %64 : vector<16x1xi32> to vector<16x2xi32>
    %66 = arith.select %63, %65, %56 : vector<16x2xi1>, vector<16x2xi32>
    %67 = vector.broadcast %15 : vector<16x1xf32> to vector<16x2xf32>
    %68 = arith.mulf %61, %67 : vector<16x2xf32>
    %c0_21 = arith.constant 0 : index
    %c0_22 = arith.constant 0 : index
    %69 = vector.load %arg5[%c0_21, %c0_22] : memref<16x2xf32, #tpu.memory_space<vmem>>, vector<16x2xf32>
    tpu.vector_store %arg5[%c0_21, %c0_22], %68 {strides = array<i32>} : memref<16x2xf32, #tpu.memory_space<vmem>>, vector<16x2xf32>,
    %c0_23 = arith.constant 0 : index
    %c0_24 = arith.constant 0 : index
    %70 = vector.load %arg6[%c0_23, %c0_24] : memref<16x2xi32, #tpu.memory_space<vmem>>, vector<16x2xi32>
    tpu.vector_store %arg6[%c0_23, %c0_24], %66 {strides = array<i32>} : memref<16x2xi32, #tpu.memory_space<vmem>>, vector<16x2xi32>,
    return
  }
  func.func @transform_0(%arg0: i32) -> (i32, i32) {
    %c0_i32 = arith.constant 0 : i32
    %c0_i32_0 = arith.constant 0 : i32
    return %arg0, %c0_i32 : i32, i32
  }
  func.func @transform_1(%arg0: i32) -> (i32, i32) {
    %c0_i32 = arith.constant 0 : i32
    %c0_i32_0 = arith.constant 0 : i32
    %c0_i32_1 = arith.constant 0 : i32
    return %c0_i32, %c0_i32_0 : i32, i32
  }
  func.func @transform_2(%arg0: i32) -> (i32, i32) {
    %c0_i32 = arith.constant 0 : i32
    %c0_i32_0 = arith.constant 0 : i32
    %c0_i32_1 = arith.constant 0 : i32
    return %c0_i32, %c0_i32_0 : i32, i32
  }
  func.func @transform_3(%arg0: i32) -> (i32, i32) {
    %c0_i32 = arith.constant 0 : i32
    %c0_i32_0 = arith.constant 0 : i32
    return %arg0, %c0_i32 : i32, i32
  }
  func.func @transform_4(%arg0: i32) -> (i32, i32) {
    %c0_i32 = arith.constant 0 : i32
    %c0_i32_0 = arith.constant 0 : i32
    return %arg0, %c0_i32 : i32, i32
  }
  func.func @transform_5(%arg0: i32) -> (i32, i32) {
    %c0_i32 = arith.constant 0 : i32
    %c0_i32_0 = arith.constant 0 : i32
    return %arg0, %c0_i32 : i32, i32
  }
}

</mosaic_0001>

<llo_original>
// kernel: tpu_custom_call.1
$region0: #{tpu_custom_call.1}
  #allocation0 [shape = 'u32[]', space=smem, size = 0x4, offset = 0x4, fixed_abs, tag = 'smem constant byte address 0x4 - core index']
  #allocation1 [shape = 'u32[72,128]{1,0:T(1,128)}', space=vmem, size = 0x9000, scoped, tag = 'internal scratch']
  %s0 = inlined_call_operand.hbm [shape: f32[16,32], index: 0, kind: input, shape index: {}]
  %s1 = inlined_call_operand.hbm [shape: bf16[32,128], index: 1, kind: input, shape index: {}]
  %s2 = inlined_call_operand.vmem [shape: f32[1,128], index: 2, kind: input, shape index: {}]
  %s3 = inlined_call_operand.hbm [shape: f32[16,128], index: 3, kind: output, shape index: {0}]
  %s4 = inlined_call_operand.vmem [shape: f32[16,2], index: 4, kind: output, shape index: {1}]
  %s5 = inlined_call_operand.vmem [shape: s32[16,2], index: 5, kind: output, shape index: {2}]
  %6 = xla_tuple %s3, %s4, %s5
  %s7 = sld [smem:[#allocation0]]
  $region46: #{tpu_custom_call.1} parent=0
    _
  %s9 = ssub.s32 1, %s7
  %s10 = scalar_select 0, %s9, %s7
  $region1: #{tpu_custom_call.1} parent=0
    #allocation2 [shape = 'u8[8192]{0}', space=vmem, size = 0x2000, scoped, tag = 'input window, operand 0, single buffered']
    #allocation3 [shape = 's32[1]{0}', space=sflag, size = 0x4, scoped, tag = 'scoped memory for tpu_custom_call.1']
    #allocation4 [shape = 's32[1]{0}', space=sflag, size = 0x4, scoped, tag = 'scoped memory for tpu_custom_call.1']
    #allocation5 [shape = 'u8[8192]{0}', space=vmem, size = 0x2000, scoped, tag = 'input window, operand 1, single buffered']
    #allocation6 [shape = 's32[1]{0}', space=sflag, size = 0x4, scoped, tag = 'scoped memory for tpu_custom_call.1']
    #allocation7 [shape = 'u8[8192]{0}', space=vmem, size = 0x2000, scoped, tag = 'output window, operand 0, single buffered']
    %11 = vsyncpa [#allocation3], 0
    %12 = vsyncpa [#allocation6], 0
    %13 = vsyncpa [#allocation4], 0
    // Predicated region
    $region2: #{tpu_custom_call.1} parent=1 // pred_check
      _
    $region3: #{tpu_custom_call.1} parent=1 // pred_check_branch
      %15 = sbr.rel (0) target = $region5
    $region4: #{tpu_custom_call.1} parent=1 // pred_region
      %17 = vsyncadd [#allocation3], 0
      %s18 = sshll.u32 %s0, 4
      %s19 = int_to_ptr.hbm [resolvable:$true] %s18
      %s20 = sshll.u32 [#allocation2], 4
      %s21 = int_to_ptr.vmem [resolvable:$true] %s20
      %26 = dma.hbm_to_vmem [thread:$0]  %s19, 256, %s21, [#allocation3], 128, 128, 8
    $region5: #{tpu_custom_call.1} parent=1 // pred_fallthru
      _
    // Predicated region
    $region6: #{tpu_custom_call.1} parent=1 // pred_check
      _
    $region7: #{tpu_custom_call.1} parent=1 // pred_check_branch
      %28 = sbr.rel (0) target = $region9
    $region8: #{tpu_custom_call.1} parent=1 // pred_region
      %30 = vsyncadd [#allocation6], 0
      %s31 = sshll.u32 %s1, 4
      %s32 = int_to_ptr.hbm [resolvable:$true] %s31
      %s33 = sshll.u32 [#allocation5], 4
      %s34 = int_to_ptr.vmem [resolvable:$true] %s33
      %39 = dma.hbm_to_vmem [thread:$0]  %s32, 256, %s34, [#allocation6], 64, 64, 4
    $region9: #{tpu_custom_call.1} parent=1 // pred_fallthru
      _
    // Predicated region
    $region10: #{tpu_custom_call.1} parent=1 // pred_check
      _
    $region11: #{tpu_custom_call.1} parent=1 // pred_check_branch
      %41 = sbr.rel (0) target = $region13
    $region12: #{tpu_custom_call.1} parent=1 // pred_region
      _
    $region13: #{tpu_custom_call.1} parent=1 // pred_fallthru
      _
    // Predicated region
    $region14: #{tpu_custom_call.1} parent=1 // pred_check
      _
    $region15: #{tpu_custom_call.1} parent=1 // pred_check_branch
      %43 = sbr.rel (0) target = $region17
    $region16: #{tpu_custom_call.1} parent=1 // pred_region
      %45 = dma.done [#allocation3], 256
    $region17: #{tpu_custom_call.1} parent=1 // pred_fallthru
      _
    // Predicated region
    $region18: #{tpu_custom_call.1} parent=1 // pred_check
      _
    $region19: #{tpu_custom_call.1} parent=1 // pred_check_branch
      %47 = sbr.rel (0) target = $region21
    $region20: #{tpu_custom_call.1} parent=1 // pred_region
      %49 = dma.done [#allocation6], 256
    $region21: #{tpu_custom_call.1} parent=1 // pred_fallthru
      _
    %v51 = vld [vmem:[#allocation2] sm:$0xff]
    %v52 = vld [vmem:[#allocation2 + $0x8] sm:$0xff]
    %v53 = vpack.c.bf16 %v52, %v51
    %v54 = vld [vmem:[#allocation5] sm:$0xf]
    %v55 = vld [vmem:[#allocation5 + $0x4] sm:$0xf]
    %v56 = vld [vmem:[#allocation5 + $0x8] sm:$0xf]
    %v57 = vld [vmem:[#allocation5 + $0xc] sm:$0xf]
    %v58 = vld [vmem:[%s2] sm:$0x1]
    %v60 = vperm.slane %v58, 0
    %v66 = vunpack.c.l.b16 %v54
    %v67 = vunpack.c.l.b16 %v55
    %v68 = vunpack.c.l.b16 %v56
    %v69 = vunpack.c.l.b16 %v57
    %v70 = vpack.c.b16 %v67, %v66
    %v71 = vpack.c.b16 %v69, %v68
    %vm74 = vcmask 261120
    %v76 = vsel %vm74, %v53, 0
    %78 = vmatpush.bf16.msra.mxu0 0
    %79 = vmatpush.bf16.msra.mxu0 0
    %80 = vmatpush.bf16.msra.mxu0 0
    %81 = vmatpush.bf16.msra.mxu0 0
    %82 = vmatpush.bf16.msra.mxu0 0
    %83 = vmatpush.bf16.msra.mxu0 0
    %84 = vmatpush.bf16.msra.mxu0 %v71
    %85 = vmatpush.bf16.msra.mxu0 %v70
    %86 = vmatmul.bf16.gmra.mxu0 %v76
    %v87 = vpop.f32.mrf.mxu0
    %v88 = vadd.f32 %v60, %v87
    %v89 = vpop.f32.mrf.mxu0
    %v90 = vadd.f32 %v60, %v89
    %91 = vdwg.mxu0
    %92 = vmax.xlane.f32.xlu0 %v88
    %v93 = vpop.xlane.xlu0 %92
    %94 = vmax.xlane.f32.xlu0 %v90
    %v95 = vpop.xlane.xlu0 %94
    %v96 = vsub.f32 %v88, %v93
    %v97 = vsub.f32 %v90, %v95
    %v98 = vmul.f32 %v96, 1.442695
    %v99 = vpow.pop %v98
    %v100 = vmul.f32 %v97, 1.442695
    %v101 = vpow.pop %v100
    %102 = vadd.xlane.f32.xlu0 %v99
    %v103 = vpop.xlane.xlu0 %102
    %104 = vadd.xlane.f32.xlu0 %v101
    %v105 = vpop.xlane.xlu0 %104
    %v106 = vrcp.pop %v103
    %v107 = vmul.f32 %v103, %v106
    %v108 = vsub.f32 1.0, %v107
    %v109 = vmul.f32 %v106, %v108
    %v110 = vadd.f32 %v106, %v109
    %vm111 = vweird.f32 %v103
    %vm112 = vweird.f32 %v106
    %vm113 = vmor %vm111, %vm112
    %v114 = vsel %vm113, %v106, %v110
    %v115 = vand.u32 2147483647, %v103
    %vm116 = vcmp.eq.f32.partialorder %v115, 8.507059e+37
    %v117 = vand.u32 %v103, 2147483648
    %v118 = vor.u32 1.1754944e-38, %v117
    %v119 = vsel %vm116, %v118, %v114
    %v120 = vmul.f32 1.0, %v119
    %v121 = vrcp.pop %v105
    %v122 = vmul.f32 %v105, %v121
    %v123 = vsub.f32 1.0, %v122
    %v124 = vmul.f32 %v121, %v123
    %v125 = vadd.f32 %v121, %v124
    %vm126 = vweird.f32 %v105
    %vm127 = vweird.f32 %v121
    %vm128 = vmor %vm126, %vm127
    %v129 = vsel %vm128, %v121, %v125
    %v130 = vand.u32 2147483647, %v105
    %vm131 = vcmp.eq.f32.partialorder %v130, 8.507059e+37
    %v132 = vand.u32 %v105, 2147483648
    %v133 = vor.u32 1.1754944e-38, %v132
    %v134 = vsel %vm131, %v133, %v129
    %v135 = vmul.f32 1.0, %v134
    %v136 = vmul.f32 %v99, %v120
    %v137 = vmul.f32 %v101, %v135
    %138 = vst [vmem:[#allocation7] sm:$0xff] %v136
    %139 = vst [vmem:[#allocation7 + $0x8] sm:$0xff] %v137
    %v140 = vlaneseq
    %v141 = vand.u32 %v140, 127
    %vm142 = vcmp.lt.s32.totalorder %v141, 8
    %v143 = vsel %vm142, %v99, -1.0
    %v144 = vsel %vm142, %v101, -1.0
    %vm145 = vcmp.eq.f32.partialorder %v88, %v93
    %vm146 = vcmp.eq.f32.partialorder %v90, %v95
    %vm147 = vmand %vm142, %vm145
    %vm148 = vmand %vm142, %vm146
    %v149 = vsel %vm147, %v141, 128
    %v150 = vsel %vm148, %v141, 128
    %v151 = vand.u32 %v149, 65535
    %v152 = vshra.s32 %v149, 16
    %v153 = vcvt.s32.f32 %v151
    %v154 = vcvt.s32.f32 %v152
    %155 = vmin.xlane.f32.xlu0 %v154
    %v156 = vpop.xlane.xlu0 %155
    %vm157 = vcmp.eq.f32.partialorder %v154, %v156
    %v158 = vsel %vm157, %v153, inf
    %159 = vmin.xlane.f32.xlu0 %v158
    %v160 = vpop.xlane.xlu0 %159
    %v161 = vcvt.f32.s32 %v160
    %v162 = vcvt.f32.s32 %v156
    %v163 = vshll.u32 %v162, 16
    %v164 = vadd.s32 %v163, %v161
    %v165 = vand.u32 %v150, 65535
    %v166 = vshra.s32 %v150, 16
    %v167 = vcvt.s32.f32 %v165
    %v168 = vcvt.s32.f32 %v166
    %169 = vmin.xlane.f32.xlu0 %v168
    %v170 = vpop.xlane.xlu0 %169
    %vm171 = vcmp.eq.f32.partialorder %v168, %v170
    %v172 = vsel %vm171, %v167, inf
    %173 = vmin.xlane.f32.xlu0 %v172
    %v174 = vpop.xlane.xlu0 %173
    %v175 = vcvt.f32.s32 %v174
    %v176 = vcvt.f32.s32 %v170
    %v177 = vshll.u32 %v176, 16
    %v178 = vadd.s32 %v177, %v175
    %vm179 = vcmp.eq.s32.totalorder %v141, %v164
    %vm180 = vcmp.eq.s32.totalorder %v141, %v178
    %v181 = vsel %vm179, -1.0, %v143
    %v182 = vsel %vm180, -1.0, %v144
    %183 = vmax.xlane.f32.xlu0 %v181
    %v184 = vpop.xlane.xlu0 %183
    %185 = vmax.xlane.f32.xlu0 %v182
    %v186 = vpop.xlane.xlu0 %185
    %vm187 = vcmp.eq.f32.partialorder %v181, %v184
    %vm188 = vcmp.eq.f32.partialorder %v182, %v186
    %v189 = vsel %vm187, %v141, 128
    %v190 = vsel %vm188, %v141, 128
    %v191 = vand.u32 %v189, 65535
    %v192 = vshra.s32 %v189, 16
    %v193 = vcvt.s32.f32 %v191
    %v194 = vcvt.s32.f32 %v192
    %195 = vmin.xlane.f32.xlu0 %v194
    %v196 = vpop.xlane.xlu0 %195
    %vm197 = vcmp.eq.f32.partialorder %v194, %v196
    %v198 = vsel %vm197, %v193, inf
    %199 = vmin.xlane.f32.xlu0 %v198
    %v200 = vpop.xlane.xlu0 %199
    %v201 = vcvt.f32.s32 %v200
    %v202 = vcvt.f32.s32 %v196
    %v203 = vshll.u32 %v202, 16
    %v204 = vadd.s32 %v203, %v201
    %v205 = vand.u32 %v190, 65535
    %v206 = vshra.s32 %v190, 16
    %v207 = vcvt.s32.f32 %v205
    %v208 = vcvt.s32.f32 %v206
    %209 = vmin.xlane.f32.xlu0 %v208
    %v210 = vpop.xlane.xlu0 %209
    %vm211 = vcmp.eq.f32.partialorder %v208, %v210
    %v212 = vsel %vm211, %v207, inf
    %213 = vmin.xlane.f32.xlu0 %v212
    %v214 = vpop.xlane.xlu0 %213
    %v215 = vcvt.f32.s32 %v214
    %v216 = vcvt.f32.s32 %v210
    %v217 = vshll.u32 %v216, 16
    %v218 = vadd.s32 %v217, %v215
    %vm219 = vcmp.eq.s32.totalorder %v141, 0
    %v220 = vsel %vm219, 1.0, 0.0
    %v221 = vsel %vm219, %v164, 0
    %v222 = vsel %vm219, %v178, 0
    %vm223 = vcmp.eq.s32.totalorder %v141, 1
    %v224 = vsel %vm223, %v184, %v220
    %v225 = vsel %vm223, %v186, %v220
    %v226 = vsel %vm223, %v204, %v221
    %v227 = vsel %vm223, %v218, %v222
    %v228 = vmul.f32 %v224, %v120
    %v229 = vmul.f32 %v225, %v135
    %vm230 = vcmask 15360
    %231 = vst.msk [vmem:[%s4] sm:$0xff] %vm230, %v228
    %232 = vst.msk [vmem:[%s4 + $0x8] sm:$0xff] %vm230, %v229
    %233 = vst.msk [vmem:[%s5] sm:$0xff] %vm230, %v226
    %234 = vst.msk [vmem:[%s5 + $0x8] sm:$0xff] %vm230, %v227
    // Predicated region
    $region22: #{tpu_custom_call.1} parent=1 // pred_check
      _
    $region23: #{tpu_custom_call.1} parent=1 // pred_check_branch
      %236 = sbr.rel (0) target = $region25
    $region24: #{tpu_custom_call.1} parent=1 // pred_region
      %238 = vsyncadd [#allocation4], 0
      %s239 = sshll.u32 [#allocation7], 4
      %s240 = int_to_ptr.vmem [resolvable:$true] %s239
      %s241 = sshll.u32 %s3, 4
      %s242 = int_to_ptr.hbm [resolvable:$true] %s241
      %247 = dma.vmem_to_hbm [thread:$0]  %s240, 256, %s242, [#allocation4], 128, 128, 8
    $region25: #{tpu_custom_call.1} parent=1 // pred_fallthru
      _
    // Predicated region
    $region26: #{tpu_custom_call.1} parent=1 // pred_check
      _
    $region27: #{tpu_custom_call.1} parent=1 // pred_check_branch
      %249 = sbr.rel (0) target = $region29
    $region28: #{tpu_custom_call.1} parent=1 // pred_region
      _
    $region29: #{tpu_custom_call.1} parent=1 // pred_fallthru
      _
    // Predicated region
    $region30: #{tpu_custom_call.1} parent=1 // pred_check
      _
    $region31: #{tpu_custom_call.1} parent=1 // pred_check_branch
      %251 = sbr.rel (0) target = $region33
    $region32: #{tpu_custom_call.1} parent=1 // pred_region
      _
    $region33: #{tpu_custom_call.1} parent=1 // pred_fallthru
      _
    // Predicated region
    $region34: #{tpu_custom_call.1} parent=1 // pred_check
      _
    $region35: #{tpu_custom_call.1} parent=1 // pred_check_branch
      %253 = sbr.rel (0) target = $region37
    $region36: #{tpu_custom_call.1} parent=1 // pred_region
      %255 = dma.done [#allocation4], 256
    $region37: #{tpu_custom_call.1} parent=1 // pred_fallthru
      _
    // Predicated region
    $region38: #{tpu_custom_call.1} parent=1 // pred_check
      _
    $region39: #{tpu_custom_call.1} parent=1 // pred_check_branch
      %257 = sbr.rel (0) target = $region41
    $region40: #{tpu_custom_call.1} parent=1 // pred_region
      _
    $region41: #{tpu_custom_call.1} parent=1 // pred_fallthru
      _
    // Predicated region
    $region42: #{tpu_custom_call.1} parent=1 // pred_check
      _
    $region43: #{tpu_custom_call.1} parent=1 // pred_check_branch
      %259 = sbr.rel (0) target = $region45
    $region44: #{tpu_custom_call.1} parent=1 // pred_region
      _
    $region45: #{tpu_custom_call.1} parent=1 // pred_fallthru
      _
    %260 = vsyncpa [#allocation3], 1
    %261 = vsyncpa [#allocation6], 1
    %262 = vsyncpa [#allocation4], 1

</llo_original>
